<compile_context>
chip_gen: v6e
topology: v6e:2x2x1
jax: 0.10.0
libtpu: 0.0.40
codegen_flags: <defaults>
</compile_context>

<pallas_src>
import jax
import jax.numpy as jnp
from jax import lax
from jax.experimental import pallas as pl
from jax.experimental.pallas import tpu as pltpu

LOSS_WEIGHT = 1e-08
_COS_THRESHOLD = 0.7


def _graph_loss_kernel(att_i_ref, att_j_ref, y_i_ref, y_j_ref, out_ref):
    i = pl.program_id(0)
    j = pl.program_id(1)

    @pl.when(jnp.logical_and(i == 0, j == 0))
    def _init():
        out_ref[0, 0] = 0.0

    att_i = att_i_ref[...].astype(jnp.float32)      # (TM, F)
    att_j = att_j_ref[...].astype(jnp.float32)      # (TN, F)
    y_i = y_i_ref[...].astype(jnp.float32)          # (TM, C)
    y_j = y_j_ref[...].astype(jnp.float32)          # (TN, C)

    # Row pre-normalization (cosine).  Exact f32 rsqrt (EUP slot); tiny guard
    # against zero-norm rows (the torch reference would produce NaN there).
    inv_i = lax.rsqrt(
        jnp.maximum(jnp.sum(att_i * att_i, axis=1, keepdims=True), 1e-30))
    inv_j = lax.rsqrt(
        jnp.maximum(jnp.sum(att_j * att_j, axis=1, keepdims=True), 1e-30))
    att_i_n = att_i * inv_i
    att_j_n = att_j * inv_j

    # (TM, TN) cosine block: contract on the feature axis directly (no .T /
    # XLU transpose materialized).
    cos = lax.dot_general(att_i_n, att_j_n, (((1,), (1,)), ((), ())),
                          preferred_element_type=jnp.float32)
    w1 = jnp.where(cos > _COS_THRESHOLD, cos, 0.0)   # single vselect

    # Partial trace contribution of this (i, j) block:
    #   sum_r rowsum(W1)_r * ||y_i_r||^2  -  sum((W1 @ y_j) * y_i)
    rowsum = jnp.sum(w1, axis=1, keepdims=True)                    # (TM, 1)
    ysq_i = jnp.sum(y_i * y_i, axis=1, keepdims=True)              # (TM, 1)
    term1 = jnp.sum(rowsum * ysq_i)
    wy = jnp.dot(w1, y_j, preferred_element_type=jnp.float32)      # (TM, C)
    term2 = jnp.sum(wy * y_i)

    out_ref[0, 0] += term1 - term2

    @pl.when(jnp.logical_and(i == pl.num_programs(0) - 1,
                             j == pl.num_programs(1) - 1))
    def _finalize():
        out_ref[0, 0] = out_ref[0, 0] * LOSS_WEIGHT


def _pick_tile(n):
    # Largest power-of-two tile (multiple of the 8-sublane granule, capped at
    # 512 so a (512, 512) f32 cosine block stays ~1 MiB) that divides n;
    # fall back to the whole axis for small / odd node counts.
    for t in (512, 256, 128, 64, 32, 16, 8):
        if n >= t and n % t == 0:
            return t
    return n


def graph_loss(y, att, *, tile_m=None, tile_n=None):
    """Pallas implementation of GraphLoss.forward(y, att). Returns a scalar."""
    n_nodes, f = att.shape
    assert y.shape[0] == n_nodes
    c = y.shape[1]

    tm = tile_m if tile_m is not None else _pick_tile(n_nodes)
    tn = tile_n if tile_n is not None else _pick_tile(n_nodes)
    assert n_nodes % tm == 0 and n_nodes % tn == 0, "tile must divide node count"
    gi, gj = n_nodes // tm, n_nodes // tn

    out = pl.pallas_call(
        _graph_loss_kernel,
        out_shape=jax.ShapeDtypeStruct((1, 1), jnp.float32),
        grid=(gi, gj),
        in_specs=[
            pl.BlockSpec((tm, f), lambda i, j: (i, 0)),   # att row-block i
            pl.BlockSpec((tn, f), lambda i, j: (j, 0)),   # att row-block j
            pl.BlockSpec((tm, c), lambda i, j: (i, 0)),   # y   row-block i
            pl.BlockSpec((tn, c), lambda i, j: (j, 0)),   # y   row-block j
        ],
        # Single scalar accumulator, resident in SMEM across the whole grid.
        out_specs=pl.BlockSpec((1, 1), lambda i, j: (0, 0),
                               memory_space=pltpu.SMEM),
        compiler_params=pltpu.CompilerParams(
            # Both grid axes reduce into the one scalar accumulator, so both
            # must be "arbitrary".  (Marking i "parallel" for 2-TC sharding
            # would require per-row-block partial outputs + a host-side sum.)
            dimension_semantics=("arbitrary", "arbitrary")),
    )(att, att, y, y)
    return out[0, 0]


def _graph_loss_ref(y, att):
    """Plain-JAX reference mirroring the PyTorch module exactly."""
    att = att.astype(jnp.float32)
    y = y.astype(jnp.float32)
    n = att.shape[0]
    row_norm = jnp.sqrt(jnp.sum(att * att, axis=1, keepdims=True))
    norm = row_norm @ row_norm.T
    w0 = (att @ att.T) / norm
    w1 = w0 * (w0 > _COS_THRESHOLD).astype(jnp.float32)
    w = w1 - jnp.eye(n, dtype=jnp.float32)
    lap = jnp.diag(jnp.sum(w, axis=1)) - w
    return LOSS_WEIGHT * jnp.trace(y.T @ lap @ y)


if __name__ == "__main__":
    key = jax.random.PRNGKey(0)
    kb, kn, ky = jax.random.split(key, 3)

    N, F, C = 16, 32, 8   # nodes, attention features, label dims
    # Two clusters of correlated rows -> a nontrivial edge set: within-cluster
    # cosine ~0.94 (well above 0.7), cross-cluster ~0 (well below), so the
    # thresholded graph and the resulting trace are non-degenerate.
    base = jax.random.normal(kb, (2, F), dtype=jnp.float32)
    cluster = jnp.repeat(jnp.arange(2), N // 2)
    att = base[cluster] + 0.25 * jax.random.normal(kn, (N, F), dtype=jnp.float32)
    y = jax.random.normal(ky, (N, C), dtype=jnp.float32)

    # tile_m/tile_n = 8 -> grid (2, 2): exercises the tiled accumulation path.
    loss = jax.block_until_ready(graph_loss(y, att, tile_m=8, tile_n=8))
    ref = jax.block_until_ready(_graph_loss_ref(y, att))

    assert jnp.allclose(loss, ref, rtol=1e-4, atol=1e-10), (loss, ref)
    print("KERNEL_OK")
</pallas_src>

<mosaic_0001>
module attributes {stable_mosaic.version = 11 : i64} {
  func.func @_graph_loss_kernel(%arg0: i32, %arg1: i32, %arg2: memref<8x32xf32, #tpu.memory_space<vmem>>, %arg3: memref<8x32xf32, #tpu.memory_space<vmem>>, %arg4: memref<8x8xf32, #tpu.memory_space<vmem>>, %arg5: memref<8x8xf32, #tpu.memory_space<vmem>>, %arg6: memref<1x1xf32, #tpu.memory_space<smem>>) attributes {dimension_semantics = [#tpu.dimension_semantics<arbitrary>, #tpu.dimension_semantics<arbitrary>], iteration_bounds = array<i64: 2, 2>, scalar_prefetch = 0 : i64, scratch_operands = 0 : i64, tpu.core_type = #tpu.core_type<tc>, window_params = [{transform_indices = @transform_0, window_bounds = array<i64: 8, 32>}, {transform_indices = @transform_1, window_bounds = array<i64: 8, 32>}, {transform_indices = @transform_2, window_bounds = array<i64: 8, 8>}, {transform_indices = @transform_3, window_bounds = array<i64: 8, 8>}, {transform_indices = @transform_4, window_bounds = array<i64: 1, 1>}]} {
    %c0_i32 = arith.constant 0 : i32
    %0 = arith.cmpi eq, %arg0, %c0_i32 : i32
    %c0_i32_0 = arith.constant 0 : i32
    %1 = arith.cmpi eq, %arg1, %c0_i32_0 : i32
    %2 = arith.andi %0, %1 : i1
    %3 = arith.extui %2 : i1 to i32
    %c0_i32_1 = arith.constant 0 : i32
    %4 = arith.cmpi ne, %3, %c0_i32_1 : i32
    scf.if %4 {
      %cst_26 = arith.constant 0.000000e+00 : f32
      %c0_27 = arith.constant 0 : index
      %c0_28 = arith.constant 0 : index
      %55 = memref.load %arg6[%c0_27, %c0_28] : memref<1x1xf32, #tpu.memory_space<smem>>
      memref.store %cst_26, %arg6[%c0_27, %c0_28] : memref<1x1xf32, #tpu.memory_space<smem>>
    } else {
    }
    %c0 = arith.constant 0 : index
    %c0_2 = arith.constant 0 : index
    %5 = vector.load %arg2[%c0, %c0_2] : memref<8x32xf32, #tpu.memory_space<vmem>>, vector<8x32xf32>
    %c0_3 = arith.constant 0 : index
    %c0_4 = arith.constant 0 : index
    %6 = vector.load %arg3[%c0_3, %c0_4] : memref<8x32xf32, #tpu.memory_space<vmem>>, vector<8x32xf32>
    %c0_5 = arith.constant 0 : index
    %c0_6 = arith.constant 0 : index
    %7 = vector.load %arg4[%c0_5, %c0_6] : memref<8x8xf32, #tpu.memory_space<vmem>>, vector<8x8xf32>
    %c0_7 = arith.constant 0 : index
    %c0_8 = arith.constant 0 : index
    %8 = vector.load %arg5[%c0_7, %c0_8] : memref<8x8xf32, #tpu.memory_space<vmem>>, vector<8x8xf32>
    %9 = arith.mulf %5, %5 : vector<8x32xf32>
    %cst = arith.constant dense<0.000000e+00> : vector<8xf32>
    %10 = vector.multi_reduction <add>, %9, %cst [1] : vector<8x32xf32> to vector<8xf32>
    %11 = vector.shape_cast %10 : vector<8xf32> to vector<8x1xf32>
    %cst_9 = arith.constant 1.000000e-30 : f32
    %12 = vector.broadcast %cst_9 : f32 to vector<8x1xf32>
    %13 = arith.maximumf %11, %12 : vector<8x1xf32>
    %14 = math.rsqrt %13 : vector<8x1xf32>
    %15 = arith.mulf %6, %6 : vector<8x32xf32>
    %cst_10 = arith.constant dense<0.000000e+00> : vector<8xf32>
    %16 = vector.multi_reduction <add>, %15, %cst_10 [1] : vector<8x32xf32> to vector<8xf32>
    %17 = vector.shape_cast %16 : vector<8xf32> to vector<8x1xf32>
    %cst_11 = arith.constant 1.000000e-30 : f32
    %18 = vector.broadcast %cst_11 : f32 to vector<8x1xf32>
    %19 = arith.maximumf %17, %18 : vector<8x1xf32>
    %20 = math.rsqrt %19 : vector<8x1xf32>
    %21 = vector.broadcast %14 : vector<8x1xf32> to vector<8x32xf32>
    %22 = arith.mulf %5, %21 : vector<8x32xf32>
    %23 = vector.broadcast %20 : vector<8x1xf32> to vector<8x32xf32>
    %24 = arith.mulf %6, %23 : vector<8x32xf32>
    %cst_12 = arith.constant dense<0.000000e+00> : vector<8x8xf32>
    %25 = tpu.matmul %22, %24, %cst_12 {dimension_numbers = #tpu.dot_dimension_numbers<[1], [1], [0], [0], [0, 0, 1, 0], [], []>} : vector<8x32xf32>, vector<8x32xf32>, vector<8x8xf32> -> vector<8x8xf32>
    %cst_13 = arith.constant 0.699999988 : f32
    %26 = vector.broadcast %cst_13 : f32 to vector<8x8xf32>
    %27 = arith.cmpf ogt, %25, %26 : vector<8x8xf32>
    %cst_14 = arith.constant 0.000000e+00 : f32
    %28 = vector.broadcast %cst_14 : f32 to vector<8x8xf32>
    %29 = arith.select %27, %25, %28 : vector<8x8xi1>, vector<8x8xf32>
    %cst_15 = arith.constant dense<0.000000e+00> : vector<8xf32>
    %30 = vector.multi_reduction <add>, %29, %cst_15 [1] : vector<8x8xf32> to vector<8xf32>
    %31 = vector.shape_cast %30 : vector<8xf32> to vector<8x1xf32>
    %32 = arith.mulf %7, %7 : vector<8x8xf32>
    %cst_16 = arith.constant dense<0.000000e+00> : vector<8xf32>
    %33 = vector.multi_reduction <add>, %32, %cst_16 [1] : vector<8x8xf32> to vector<8xf32>
    %34 = vector.shape_cast %33 : vector<8xf32> to vector<8x1xf32>
    %35 = arith.mulf %31, %34 : vector<8x1xf32>
    %36 = vector.shape_cast %35 : vector<8x1xf32> to vector<1x8x1xf32>
    %cst_17 = arith.constant dense<0.000000e+00> : vector<1xf32>
    %37 = vector.multi_reduction <add>, %36, %cst_17 [1, 2] : vector<1x8x1xf32> to vector<1xf32>
    %38 = vector.shape_cast %37 : vector<1xf32> to vector<1x1x1xf32>
    %39 = vector.extract %38[0, 0, 0] : f32 from vector<1x1x1xf32>
    %cst_18 = arith.constant dense<0.000000e+00> : vector<8x8xf32>
    %40 = tpu.matmul %29, %8, %cst_18 {dimension_numbers = #tpu.dot_dimension_numbers<[1], [0], [0], [1], [0, 0, 1, 1], [], []>} : vector<8x8xf32>, vector<8x8xf32>, vector<8x8xf32> -> vector<8x8xf32>
    %41 = arith.mulf %40, %7 : vector<8x8xf32>
    %42 = vector.shape_cast %41 : vector<8x8xf32> to vector<1x8x8xf32>
    %cst_19 = arith.constant dense<0.000000e+00> : vector<1xf32>
    %43 = vector.multi_reduction <add>, %42, %cst_19 [1, 2] : vector<1x8x8xf32> to vector<1xf32>
    %44 = vector.shape_cast %43 : vector<1xf32> to vector<1x1x1xf32>
    %45 = vector.extract %44[0, 0, 0] : f32 from vector<1x1x1xf32>
    %c0_20 = arith.constant 0 : index
    %c0_21 = arith.constant 0 : index
    %46 = memref.load %arg6[%c0_20, %c0_21] : memref<1x1xf32, #tpu.memory_space<smem>>
    %47 = arith.subf %39, %45 : f32
    %48 = arith.addf %46, %47 : f32
    %c0_22 = arith.constant 0 : index
    %c0_23 = arith.constant 0 : index
    %49 = memref.load %arg6[%c0_22, %c0_23] : memref<1x1xf32, #tpu.memory_space<smem>>
    memref.store %48, %arg6[%c0_22, %c0_23] : memref<1x1xf32, #tpu.memory_space<smem>>
    %c1_i32 = arith.constant 1 : i32
    %50 = arith.cmpi eq, %arg0, %c1_i32 : i32
    %c1_i32_24 = arith.constant 1 : i32
    %51 = arith.cmpi eq, %arg1, %c1_i32_24 : i32
    %52 = arith.andi %50, %51 : i1
    %53 = arith.extui %52 : i1 to i32
    %c0_i32_25 = arith.constant 0 : i32
    %54 = arith.cmpi ne, %53, %c0_i32_25 : i32
    scf.if %54 {
      %c0_26 = arith.constant 0 : index
      %c0_27 = arith.constant 0 : index
      %55 = memref.load %arg6[%c0_26, %c0_27] : memref<1x1xf32, #tpu.memory_space<smem>>
      %cst_28 = arith.constant 9.99999993E-9 : f32
      %56 = arith.mulf %55, %cst_28 : f32
      %c0_29 = arith.constant 0 : index
      %c0_30 = arith.constant 0 : index
      %57 = memref.load %arg6[%c0_29, %c0_30] : memref<1x1xf32, #tpu.memory_space<smem>>
      memref.store %56, %arg6[%c0_29, %c0_30] : memref<1x1xf32, #tpu.memory_space<smem>>
    } else {
    }
    return
  }
  func.func @transform_0(%arg0: i32, %arg1: i32) -> (i32, i32) {
    %c0_i32 = arith.constant 0 : i32
    %c0_i32_0 = arith.constant 0 : i32
    return %arg0, %c0_i32 : i32, i32
  }
  func.func @transform_1(%arg0: i32, %arg1: i32) -> (i32, i32) {
    %c0_i32 = arith.constant 0 : i32
    %c0_i32_0 = arith.constant 0 : i32
    return %arg1, %c0_i32 : i32, i32
  }
  func.func @transform_2(%arg0: i32, %arg1: i32) -> (i32, i32) {
    %c0_i32 = arith.constant 0 : i32
    %c0_i32_0 = arith.constant 0 : i32
    return %arg0, %c0_i32 : i32, i32
  }
  func.func @transform_3(%arg0: i32, %arg1: i32) -> (i32, i32) {
    %c0_i32 = arith.constant 0 : i32
    %c0_i32_0 = arith.constant 0 : i32
    return %arg1, %c0_i32 : i32, i32
  }
  func.func @transform_4(%arg0: i32, %arg1: i32) -> (i32, i32) {
    %c0_i32 = arith.constant 0 : i32
    %c0_i32_0 = arith.constant 0 : i32
    %c0_i32_1 = arith.constant 0 : i32
    return %c0_i32, %c0_i32_0 : i32, i32
  }
}

</mosaic_0001>

<llo_original>
// kernel: tpu_custom_call.1
$region0: #{tpu_custom_call.1}
  #allocation0 [shape = 'u32[]', space=smem, size = 0x4, offset = 0x4, fixed_abs, tag = 'smem constant byte address 0x4 - core index']
  #allocation1 [shape = 'u32[144,128]{1,0:T(1,128)}', space=vmem, size = 0x12000, scoped, tag = 'internal scratch']
  %s0 = inlined_call_operand.vmem [shape: f32[16,32], index: 0, kind: input, shape index: {}]
  %s1 = inlined_call_operand.vmem [shape: f32[16,32], index: 1, kind: input, shape index: {}]
  %s2 = inlined_call_operand.vmem [shape: f32[16,8], index: 2, kind: input, shape index: {}]
  %s3 = inlined_call_operand.vmem [shape: f32[16,8], index: 3, kind: input, shape index: {}]
  %s4 = inlined_call_operand.hbm [shape: f32[1,1], index: 4, kind: output, shape index: {}]
  %s5 = sld [smem:[#allocation0]]
  $region57: #{tpu_custom_call.1} parent=0
    _
  %s7 = ssub.s32 1, %s5
  %s8 = scalar_select 0, %s7, %s5
  $region1: #{tpu_custom_call.1} parent=0
    #allocation2 [shape = 'u8[512]{0}', space=smem, size = 0x200, scoped, tag = 'output window, operand 0, single buffered']
    #allocation3 [shape = 's32[2]{0}', space=sflag, size = 0x8, scoped, tag = 'scoped memory for tpu_custom_call.1']
    %9 = vsyncpa [#allocation3], 0
    loop: start=0, step=1, limit=6
    $region2: #{tpu_custom_call.1} parent=1 // loop_pre_header
      _
    $region3: #{tpu_custom_call.1} parent=1 // loop_header
      %s11 = sphi 0, %s15
      %p12 = scmp.ge.s32.totalorder %s11, 6
      %s18 = sphi 0, %s30
      %s19 = sphi 0, %s26
      %s20 = sphi 0, %s18
      %s21 = sphi 0, %s19
      %s22 = sphi 0, %s20
      %s23 = sphi 0, %s21
      %s33 = sphi 0, %s35
      %s36 = sphi 0, %s33
      %s37 = sphi 0, %s36
      %s53 = sphi 0, %s37
      %s59 = sphi 0, %s61
      %s62 = sphi 0, %s59
      %s63 = sphi 0, %s62
      %s79 = sphi 0, %s63
      %s85 = sphi 0, %s87
      %s88 = sphi 0, %s85
      %s89 = sphi 0, %s88
      %s105 = sphi 0, %s89
      %s111 = sphi 0, %s113
      %s114 = sphi 0, %s111
      %s115 = sphi 0, %s114
      %s131 = sphi 0, %s115
      %s135 = sphi 0, %s135
      %s137 = sphi 0, %s135
      %s138 = sphi 0, %s137
      %s152 = sphi 0, %s138
    $region4: #{tpu_custom_call.1} parent=1 // loop_header_branch
      %14 = sbr.rel (%p12) target = $region8
    $region5: #{tpu_custom_call.1} parent=1 // loop_body
      %s16 = ssub.s32 %s11, 1
      %s17 = ssub.s32 %s11, 2
      %s24 = sadd.s32 1, %s19
      %p25 = scmp.ge.s32.totalorder %s24, 2
      %s26 = scalar_select %p25, 0, %s24
      %s27 = sadd.s32 1, %s18
      %s28 = scalar_select %p25, %s27, %s18
      %p29 = scmp.ge.s32.totalorder %s28, 2
      %s30 = scalar_select %p29, 0, %s28
      %s31 = ssub.s32 %s18, %s30
      %p32 = scmp.eq.s32.totalorder %s31, 0
      %s34 = sadd.s32 %s33, 1
      %s35 = scalar_select %p32, %s33, %s34
      %p38 = pneg %p32
      %p39 = scmp.eq.s32.totalorder %s11, 3
      %p40 = por %p38, %p39
      %p41 = scmp.ne.s32.totalorder %s33, %s36
      %p42 = scmp.eq.s32.totalorder %s11, 0
      %p43 = por %p41, %p42
      %p44 = scmp.ne.s32.totalorder %s33, %s36
      %p45 = scmp.eq.s32.totalorder %s16, 3
      %p46 = por %p44, %p45
      %p47 = scmp.ne.s32.totalorder %s36, %s37
      %p48 = scmp.eq.s32.totalorder %s16, 0
      %p49 = por %p47, %p48
      %p50 = scmp.ne.s32.totalorder %s36, %s37
      %p51 = scmp.eq.s32.totalorder %s17, 3
      %p52 = por %p50, %p51
      %p54 = scmp.ne.s32.totalorder %s37, %s53
      %p55 = scmp.eq.s32.totalorder %s17, 0
      %p56 = por %p54, %p55
      %s57 = ssub.s32 %s19, %s26
      %p58 = scmp.eq.s32.totalorder %s57, 0
      %s60 = sadd.s32 %s59, 1
      %s61 = scalar_select %p58, %s59, %s60
      %p64 = pneg %p58
      %p65 = scmp.eq.s32.totalorder %s11, 3
      %p66 = por %p64, %p65
      %p67 = scmp.ne.s32.totalorder %s59, %s62
      %p68 = scmp.eq.s32.totalorder %s11, 0
      %p69 = por %p67, %p68
      %p70 = scmp.ne.s32.totalorder %s59, %s62
      %p71 = scmp.eq.s32.totalorder %s16, 3
      %p72 = por %p70, %p71
      %p73 = scmp.ne.s32.totalorder %s62, %s63
      %p74 = scmp.eq.s32.totalorder %s16, 0
      %p75 = por %p73, %p74
      %p76 = scmp.ne.s32.totalorder %s62, %s63
      %p77 = scmp.eq.s32.totalorder %s17, 3
      %p78 = por %p76, %p77
      %p80 = scmp.ne.s32.totalorder %s63, %s79
      %p81 = scmp.eq.s32.totalorder %s17, 0
      %p82 = por %p80, %p81
      %s83 = ssub.s32 %s18, %s30
      %p84 = scmp.eq.s32.totalorder %s83, 0
      %s86 = sadd.s32 %s85, 1
      %s87 = scalar_select %p84, %s85, %s86
      %p90 = pneg %p84
      %p91 = scmp.eq.s32.totalorder %s11, 3
      %p92 = por %p90, %p91
      %p93 = scmp.ne.s32.totalorder %s85, %s88
      %p94 = scmp.eq.s32.totalorder %s11, 0
      %p95 = por %p93, %p94
      %p96 = scmp.ne.s32.totalorder %s85, %s88
      %p97 = scmp.eq.s32.totalorder %s16, 3
      %p98 = por %p96, %p97
      %p99 = scmp.ne.s32.totalorder %s88, %s89
      %p100 = scmp.eq.s32.totalorder %s16, 0
      %p101 = por %p99, %p100
      %p102 = scmp.ne.s32.totalorder %s88, %s89
      %p103 = scmp.eq.s32.totalorder %s17, 3
      %p104 = por %p102, %p103
      %p106 = scmp.ne.s32.totalorder %s89, %s105
      %p107 = scmp.eq.s32.totalorder %s17, 0
      %p108 = por %p106, %p107
      %s109 = ssub.s32 %s19, %s26
      %p110 = scmp.eq.s32.totalorder %s109, 0
      %s112 = sadd.s32 %s111, 1
      %s113 = scalar_select %p110, %s111, %s112
      %p116 = pneg %p110
      %p117 = scmp.eq.s32.totalorder %s11, 3
      %p118 = por %p116, %p117
      %p119 = scmp.ne.s32.totalorder %s111, %s114
      %p120 = scmp.eq.s32.totalorder %s11, 0
      %p121 = por %p119, %p120
      %p122 = scmp.ne.s32.totalorder %s111, %s114
      %p123 = scmp.eq.s32.totalorder %s16, 3
      %p124 = por %p122, %p123
      %p125 = scmp.ne.s32.totalorder %s114, %s115
      %p126 = scmp.eq.s32.totalorder %s16, 0
      %p127 = por %p125, %p126
      %p128 = scmp.ne.s32.totalorder %s114, %s115
      %p129 = scmp.eq.s32.totalorder %s17, 3
      %p130 = por %p128, %p129
      %p132 = scmp.ne.s32.totalorder %s115, %s131
      %p133 = scmp.eq.s32.totalorder %s17, 0
      %p134 = por %p132, %p133
      %s136 = sadd.s32 %s135, 1
      %p139 = scmp.eq.s32.totalorder %s11, 3
      %p140 = scmp.ne.s32.totalorder %s135, %s137
      %p141 = scmp.eq.s32.totalorder %s11, 0
      %p142 = por %p140, %p141
      %p143 = scmp.ne.s32.totalorder %s135, %s137
      %p144 = scmp.eq.s32.totalorder %s16, 3
      %p145 = por %p143, %p144
      %p146 = scmp.ne.s32.totalorder %s137, %s138
      %p147 = scmp.eq.s32.totalorder %s16, 0
      %p148 = por %p146, %p147
      %p149 = scmp.ne.s32.totalorder %s137, %s138
      %p150 = scmp.eq.s32.totalorder %s17, 3
      %p151 = por %p149, %p150
      %p153 = scmp.ne.s32.totalorder %s138, %s152
      %p154 = scmp.eq.s32.totalorder %s17, 0
      %p155 = por %p153, %p154
      %p156 = scmp.le.s32.totalorder 1, %s11
      %p157 = scmp.lt.s32.totalorder %s11, 5
      %p158 = pnand %p156, %p157
      %p159 = pneg %p158
      // Predicated region
      $region9: #{tpu_custom_call.1} parent=5 // pred_check
        _
      $region10: #{tpu_custom_call.1} parent=5 // pred_check_branch
        %161 = sbr.rel (%p158) target = $region12
      $region11: #{tpu_custom_call.1} parent=5 // pred_region
        %s162 = ssub.s32 %s11, 1
      $region12: #{tpu_custom_call.1} parent=5 // pred_fallthru
        _
      %p163 = scmp.lt.s32.totalorder %s11, 4
      // Predicated region
      $region13: #{tpu_custom_call.1} parent=5 // pred_check
        %p164 = pneg %p163
      $region14: #{tpu_custom_call.1} parent=5 // pred_check_branch
        %166 = sbr.rel (%p164) target = $region16
      $region15: #{tpu_custom_call.1} parent=5 // pred_region
        // Predicated region
        $region17: #{tpu_custom_call.1} parent=15 // pred_check
          %p167 = pneg %p43
        $region18: #{tpu_custom_call.1} parent=15 // pred_check_branch
          %169 = sbr.rel (%p167) target = $region20
        $region19: #{tpu_custom_call.1} parent=15 // pred_region
          %p170 = scmp.lt.s32.totalorder %s18, 1
          %s171 = scalar_select %p170, %s18, 1
          %s172 = smul.addr %s171, 8
          %s173 = scalar_lea.vmem %s0, %s172
        $region20: #{tpu_custom_call.1} parent=15 // pred_fallthru
          _
        // Predicated region
        $region21: #{tpu_custom_call.1} parent=15 // pred_check
          %p174 = pneg %p69
        $region22: #{tpu_custom_call.1} parent=15 // pred_check_branch
          %176 = sbr.rel (%p174) target = $region24
        $region23: #{tpu_custom_call.1} parent=15 // pred_region
          %p177 = scmp.lt.s32.totalorder %s19, 1
          %s178 = scalar_select %p177, %s19, 1
          %s179 = smul.addr %s178, 8
          %s180 = scalar_lea.vmem %s1, %s179
        $region24: #{tpu_custom_call.1} parent=15 // pred_fallthru
          _
        // Predicated region
        $region25: #{tpu_custom_call.1} parent=15 // pred_check
          %p181 = pneg %p95
        $region26: #{tpu_custom_call.1} parent=15 // pred_check_branch
          %183 = sbr.rel (%p181) target = $region28
        $region27: #{tpu_custom_call.1} parent=15 // pred_region
          %p184 = scmp.lt.s32.totalorder %s18, 1
          %s185 = scalar_select %p184, %s18, 1
          %s186 = smul.addr %s185, 8
          %s187 = scalar_lea.vmem %s2, %s186
        $region28: #{tpu_custom_call.1} parent=15 // pred_fallthru
          _
        // Predicated region
        $region29: #{tpu_custom_call.1} parent=15 // pred_check
          %p188 = pneg %p121
        $region30: #{tpu_custom_call.1} parent=15 // pred_check_branch
          %190 = sbr.rel (%p188) target = $region32
        $region31: #{tpu_custom_call.1} parent=15 // pred_region
          %p191 = scmp.lt.s32.totalorder %s19, 1
          %s192 = scalar_select %p191, %s19, 1
          %s193 = smul.addr %s192, 8
          %s194 = scalar_lea.vmem %s3, %s193
        $region32: #{tpu_custom_call.1} parent=15 // pred_fallthru
          _
      $region16: #{tpu_custom_call.1} parent=5 // pred_fallthru
        _
      %p195 = scmp.le.s32.totalorder 1, %s11
      %p196 = scmp.lt.s32.totalorder %s11, 5
      %p197 = pnand %p195, %p196
      %p198 = pneg %p197
      // Predicated region
      $region33: #{tpu_custom_call.1} parent=5 // pred_check
        _
      $region34: #{tpu_custom_call.1} parent=5 // pred_check_branch
        %200 = sbr.rel (%p197) target = $region36
      $region35: #{tpu_custom_call.1} parent=5 // pred_region
        %s201 = ssub.s32 %s11, 1
        %p202 = scmp.lt.s32.totalorder %s20, 1
        %s203 = scalar_select %p202, %s20, 1
        %s204 = smul.addr %s203, 8
        %s205 = scalar_lea.vmem %s0, %s204
        %p206 = pneg %p49
        %p207 = pneg %p46
        %p208 = scmp.lt.s32.totalorder %s21, 1
        %s209 = scalar_select %p208, %s21, 1
        %s210 = smul.addr %s209, 8
        %s211 = scalar_lea.vmem %s1, %s210
        %p212 = pneg %p75
        %p213 = pneg %p72
        %p214 = scmp.lt.s32.totalorder %s20, 1
        %s215 = scalar_select %p214, %s20, 1
        %s216 = smul.addr %s215, 8
        %s217 = scalar_lea.vmem %s2, %s216
        %p218 = pneg %p101
        %p219 = pneg %p98
        %p220 = scmp.lt.s32.totalorder %s21, 1
        %s221 = scalar_select %p220, %s21, 1
        %s222 = smul.addr %s221, 8
        %s223 = scalar_lea.vmem %s3, %s222
        %p224 = pneg %p127
        %p225 = pneg %p124
        %p226 = pneg %p148
        %p227 = pneg %p145
        %p228 = scmp.lt.s32.totalorder %s20, 1
        %s229 = scalar_select %p228, %s20, 1
        %s230 = smul.addr %s229, 8
        %s231 = scalar_lea.vmem %s0, %s230
        %p232 = scmp.lt.s32.totalorder %s21, 1
        %s233 = scalar_select %p232, %s21, 1
        %s234 = smul.addr %s233, 8
        %s235 = scalar_lea.vmem %s1, %s234
        %p236 = scmp.lt.s32.totalorder %s20, 1
        %s237 = scalar_select %p236, %s20, 1
        %s238 = smul.addr %s237, 8
        %s239 = scalar_lea.vmem %s2, %s238
        %p240 = scmp.lt.s32.totalorder %s21, 1
        %s241 = scalar_select %p240, %s21, 1
        %s242 = smul.addr %s241, 8
        %s243 = scalar_lea.vmem %s3, %s242
        %p244 = scmp.eq.s32.totalorder %s20, 0
        %p245 = scmp.eq.s32.totalorder %s21, 0
        %p246 = pnand %p244, %p245
        %p247 = pneg %p246
        // Predicated region
        $region37: #{tpu_custom_call.1} parent=35 // pred_check
          _
        $region38: #{tpu_custom_call.1} parent=35 // pred_check_branch
          %249 = sbr.rel (%p246) target = $region40
        $region39: #{tpu_custom_call.1} parent=35 // pred_region
          %s250 = scalar_lea.smem [#allocation2], 0
          %251 = sst [smem:[%s250]] 0.0
        $region40: #{tpu_custom_call.1} parent=35 // pred_fallthru
          _
        %v252 = vld [vmem:[%s231] sm:$0xff]
        %v253 = vld [vmem:[%s235] sm:$0xff]
        %v254 = vld [vmem:[%s239] sm:$0xff]
        %v255 = vld [vmem:[%s243] sm:$0xff]
        %v256 = vmul.f32 %v252, %v252
        %vm257 = vcmask 261120
        %v258 = vsel %vm257, %v256, 0.0
        %259 = vadd.xlane.f32.xlu0 %v258
        %v260 = vpop.xlane.xlu0 %259
        %v261 = vmax.f32 %v260, 1e-30
        %v262 = vrsqrt.pop %v261
        %v263 = vmul.f32 %v253, %v253
        %v264 = vsel %vm257, %v263, 0.0
        %265 = vadd.xlane.f32.xlu0 %v264
        %v266 = vpop.xlane.xlu0 %265
        %v267 = vmax.f32 %v266, 1e-30
        %v268 = vrsqrt.pop %v267
        %v269 = vmul.f32 %v252, %v262
        %v270 = vmul.f32 %v253, %v268
        %v272 = vsel %vm257, %v269, 0
        %v275 = vsel %vm257, %v270, 0
        %277 = vmatprep.subr.mxu0 0.0
        %278 = vmatpush1.xpose.msra.mxu0 0.0
        %279 = vmatprep.subr.mxu0 0.0
        %280 = vmatpush1.xpose.msra.mxu0 0.0
        %281 = vmatprep.subr.mxu0 0.0
        %282 = vmatpush1.xpose.msra.mxu0 0.0
        %283 = vmatprep.subr.mxu0 0.0
        %284 = vmatpush1.xpose.msra.mxu0 0.0
        %285 = vmatprep.subr.mxu0 0.0
        %286 = vmatpush1.xpose.msra.mxu0 0.0
        %287 = vmatprep.subr.mxu0 0.0
        %288 = vmatpush1.xpose.msra.mxu0 0.0
        %289 = vmatprep.subr.mxu0 0.0
        %290 = vmatpush1.xpose.msra.mxu0 0.0
        %291 = vmatprep.subr.mxu0 0.0
        %292 = vmatpush1.xpose.msra.mxu0 0.0
        %293 = vmatprep.subr.mxu0 0.0
        %294 = vmatpush1.xpose.msra.mxu0 0.0
        %295 = vmatprep.subr.mxu0 0.0
        %296 = vmatpush1.xpose.msra.mxu0 0.0
        %297 = vmatprep.subr.mxu0 0.0
        %298 = vmatpush1.xpose.msra.mxu0 0.0
        %299 = vmatprep.subr.mxu0 0.0
        %300 = vmatpush1.xpose.msra.mxu0 0.0
        %301 = vmatprep.subr.mxu0 0.0
        %302 = vmatpush1.xpose.msra.mxu0 0.0
        %303 = vmatprep.subr.mxu0 0.0
        %304 = vmatpush1.xpose.msra.mxu0 0.0
        %305 = vmatprep.subr.mxu0 0.0
        %306 = vmatpush1.xpose.msra.mxu0 0.0
        %307 = vmatprep.subr.mxu0 0.0
        %308 = vmatpush1.xpose.msra.mxu0 %v275
        %309 = vmatprep.subr.mxu0 0.0
        %310 = vmatpush2.xpose.msra.mxu0 0.0
        %311 = vmatprep.subr.mxu0 0.0
        %312 = vmatpush2.xpose.msra.mxu0 0.0
        %313 = vmatprep.subr.mxu0 0.0
        %314 = vmatpush2.xpose.msra.mxu0 0.0
        %315 = vmatprep.subr.mxu0 0.0
        %316 = vmatpush2.xpose.msra.mxu0 0.0
        %317 = vmatprep.subr.mxu0 0.0
        %318 = vmatpush2.xpose.msra.mxu0 0.0
        %319 = vmatprep.subr.mxu0 0.0
        %320 = vmatpush2.xpose.msra.mxu0 0.0
        %321 = vmatprep.subr.mxu0 0.0
        %322 = vmatpush2.xpose.msra.mxu0 0.0
        %323 = vmatprep.subr.mxu0 0.0
        %324 = vmatpush2.xpose.msra.mxu0 0.0
        %325 = vmatprep.subr.mxu0 0.0
        %326 = vmatpush2.xpose.msra.mxu0 0.0
        %327 = vmatprep.subr.mxu0 0.0
        %328 = vmatpush2.xpose.msra.mxu0 0.0
        %329 = vmatprep.subr.mxu0 0.0
        %330 = vmatpush2.xpose.msra.mxu0 0.0
        %331 = vmatprep.subr.mxu0 0.0
        %332 = vmatpush2.xpose.msra.mxu0 0.0
        %333 = vmatprep.subr.mxu0 0.0
        %334 = vmatpush2.xpose.msra.mxu0 0.0
        %335 = vmatprep.subr.mxu0 0.0
        %336 = vmatpush2.xpose.msra.mxu0 0.0
        %337 = vmatprep.subr.mxu0 0.0
        %338 = vmatpush2.xpose.msra.mxu0 0.0
        %339 = vmatprep.subr.mxu0 0.0
        %340 = vmatpush2.xpose.msra.mxu0 0.0
        %341 = vmatprep.mubr.f32.mxu0 0.0
        %342 = vmatmul.mubr.f32.gmra.mxu0 %v272
        %v343 = vpop.f32.mrf.mxu0
        %v344 = vadd.f32 0.0, %v343
        %v345 = vpop.f32.mrf.mxu0
        %346 = vdwg.mxu0
        %vm347 = vcmp.gt.f32.partialorder %v344, 0.7
        %v348 = vsel %vm347, %v344, 0.0
        %vm349 = vcmask 64512
        %v350 = vsel %vm349, %v348, 0.0
        %351 = vadd.xlane.f32.xlu0 %v350
        %v352 = vpop.xlane.xlu0 %351
        %v353 = vmul.f32 %v254, %v254
        %v354 = vsel %vm349, %v353, 0.0
        %355 = vadd.xlane.f32.xlu0 %v354
        %v356 = vpop.xlane.xlu0 %355
        %v357 = vmul.f32 %v352, %v356
        %vm358 = vcmask 7168
        %v359 = vsel %vm358, %v357, 0.0
        %360 = vadd.xlane.f32.xlu0 %v359
        %v361 = vpop.xlane.xlu0 %360
        %v362 = vrot.slane %v361, 4
        %v363 = vadd.f32 %v361, %v362
        %v364 = vrot.slane %v363, 2
        %v365 = vadd.f32 %v363, %v364
        %v366 = vrot.slane %v365, 1
        %v367 = vadd.f32 %v365, %v366
        %s368 = vtos %v367
        %v370 = vsel %vm349, %v348, 0
        %372 = vmatprep.subr.mxu0 0.0
        %373 = vmatpush1.msra.mxu0 0.0
        %374 = vmatprep.subr.mxu0 0.0
        %375 = vmatpush1.msra.mxu0 0.0
        %376 = vmatprep.subr.mxu0 0.0
        %377 = vmatpush1.msra.mxu0 0.0
        %378 = vmatprep.subr.mxu0 0.0
        %379 = vmatpush1.msra.mxu0 0.0
        %380 = vmatprep.subr.mxu0 0.0
        %381 = vmatpush1.msra.mxu0 0.0
        %382 = vmatprep.subr.mxu0 0.0
        %383 = vmatpush1.msra.mxu0 0.0
        %384 = vmatprep.subr.mxu0 0.0
        %385 = vmatpush1.msra.mxu0 0.0
        %386 = vmatprep.subr.mxu0 0.0
        %387 = vmatpush1.msra.mxu0 0.0
        %388 = vmatprep.subr.mxu0 0.0
        %389 = vmatpush1.msra.mxu0 0.0
        %390 = vmatprep.subr.mxu0 0.0
        %391 = vmatpush1.msra.mxu0 0.0
        %392 = vmatprep.subr.mxu0 0.0
        %393 = vmatpush1.msra.mxu0 0.0
        %394 = vmatprep.subr.mxu0 0.0
        %395 = vmatpush1.msra.mxu0 0.0
        %396 = vmatprep.subr.mxu0 0.0
        %397 = vmatpush1.msra.mxu0 0.0
        %398 = vmatprep.subr.mxu0 0.0
        %399 = vmatpush1.msra.mxu0 0.0
        %400 = vmatprep.subr.mxu0 0.0
        %401 = vmatpush1.msra.mxu0 0.0
        %402 = vmatprep.subr.mxu0 0.0
        %403 = vmatpush1.msra.mxu0 %v255
        %404 = vmatprep.subr.mxu0 0.0
        %405 = vmatpush2.msra.mxu0 0.0
        %406 = vmatprep.subr.mxu0 0.0
        %407 = vmatpush2.msra.mxu0 0.0
        %408 = vmatprep.subr.mxu0 0.0
        %409 = vmatpush2.msra.mxu0 0.0
        %410 = vmatprep.subr.mxu0 0.0
        %411 = vmatpush2.msra.mxu0 0.0
        %412 = vmatprep.subr.mxu0 0.0
        %413 = vmatpush2.msra.mxu0 0.0
        %414 = vmatprep.subr.mxu0 0.0
        %415 = vmatpush2.msra.mxu0 0.0
        %416 = vmatprep.subr.mxu0 0.0
        %417 = vmatpush2.msra.mxu0 0.0
        %418 = vmatprep.subr.mxu0 0.0
        %419 = vmatpush2.msra.mxu0 0.0
        %420 = vmatprep.subr.mxu0 0.0
        %421 = vmatpush2.msra.mxu0 0.0
        %422 = vmatprep.subr.mxu0 0.0
        %423 = vmatpush2.msra.mxu0 0.0
        %424 = vmatprep.subr.mxu0 0.0
        %425 = vmatpush2.msra.mxu0 0.0
        %426 = vmatprep.subr.mxu0 0.0
        %427 = vmatpush2.msra.mxu0 0.0
        %428 = vmatprep.subr.mxu0 0.0
        %429 = vmatpush2.msra.mxu0 0.0
        %430 = vmatprep.subr.mxu0 0.0
        %431 = vmatpush2.msra.mxu0 0.0
        %432 = vmatprep.subr.mxu0 0.0
        %433 = vmatpush2.msra.mxu0 0.0
        %434 = vmatprep.subr.mxu0 0.0
        %435 = vmatpush2.msra.mxu0 0.0
        %436 = vmatprep.mubr.f32.mxu0 0.0
        %437 = vmatmul.mubr.f32.gmra.mxu0 %v370
        %v438 = vpop.f32.mrf.mxu0
        %v439 = vadd.f32 0.0, %v438
        %v440 = vpop.f32.mrf.mxu0
        %441 = vdwg.mxu0
        %v442 = vmul.f32 %v439, %v254
        %v443 = vsel %vm349, %v442, 0.0
        %444 = vadd.xlane.f32.xlu0 %v443
        %v445 = vpop.xlane.xlu0 %444
        %v446 = vrot.slane %v445, 4
        %v447 = vadd.f32 %v445, %v446
        %v448 = vrot.slane %v447, 2
        %v449 = vadd.f32 %v447, %v448
        %v450 = vrot.slane %v449, 1
        %v451 = vadd.f32 %v449, %v450
        %s452 = vtos %v451
        %s453 = sld [smem:[#allocation2]]
        %s454 = ssub.f32 %s368, %s452
        %s455 = sadd.f32 %s453, %s454
        %s456 = scalar_lea.smem [#allocation2], 0
        %457 = sst [smem:[%s456]] %s455
        %p458 = scmp.eq.s32.totalorder %s20, 1
        %p459 = scmp.eq.s32.totalorder %s21, 1
        %p460 = pnand %p458, %p459
        %p461 = pneg %p460
        // Predicated region
        $region41: #{tpu_custom_call.1} parent=35 // pred_check
          _
        $region42: #{tpu_custom_call.1} parent=35 // pred_check_branch
          %463 = sbr.rel (%p460) target = $region44
        $region43: #{tpu_custom_call.1} parent=35 // pred_region
          %s464 = sld [smem:[#allocation2]]
          %s465 = smul.f32 %s464, 1e-08
          %466 = sst [smem:[%s456]] %s465
        $region44: #{tpu_custom_call.1} parent=35 // pred_fallthru
          _
        // Predicated region
        $region45: #{tpu_custom_call.1} parent=35 // pred_check
          %p467 = pneg %p145
        $region46: #{tpu_custom_call.1} parent=35 // pred_check_branch
          %469 = sbr.rel (%p467) target = $region48
        $region47: #{tpu_custom_call.1} parent=35 // pred_region
          %s471 = ssub.s32 16, 16
          %472 = vsyncadd [#allocation3], %s471
          %475 = dma.smem_to_hbm [#allocation2], 16, %s4, [#allocation3]
        $region48: #{tpu_custom_call.1} parent=35 // pred_fallthru
          _
        // Predicated region
        $region49: #{tpu_custom_call.1} parent=35 // pred_check
          %p476 = pneg %p145
        $region50: #{tpu_custom_call.1} parent=35 // pred_check_branch
          %478 = sbr.rel (%p476) target = $region52
        $region51: #{tpu_custom_call.1} parent=35 // pred_region
          %479 = dma.done [#allocation3], 16
        $region52: #{tpu_custom_call.1} parent=35 // pred_fallthru
          _
        %480 = sfence
      $region36: #{tpu_custom_call.1} parent=5 // pred_fallthru
        _
      %p481 = scmp.le.s32.totalorder 2, %s11
      // Predicated region
      $region53: #{tpu_custom_call.1} parent=5 // pred_check
        %p482 = pneg %p481
      $region54: #{tpu_custom_call.1} parent=5 // pred_check_branch
        %484 = sbr.rel (%p482) target = $region56
      $region55: #{tpu_custom_call.1} parent=5 // pred_region
        %s485 = ssub.s32 %s11, 2
      $region56: #{tpu_custom_call.1} parent=5 // pred_fallthru
        _
    $region6: #{tpu_custom_call.1} parent=1 // loop_footer
      %s15 = sadd.s32 1, %s11
    $region7: #{tpu_custom_call.1} parent=1 // loop_footer_branch
      %10 = sbr.rel target = $region3
    $region8: #{tpu_custom_call.1} parent=1 // loop_exit
      _
    %486 = vsyncpa [#allocation3], 1
    %s487 = scalar_lea.sflag [#allocation3], 1
    %488 = vsyncpa %s487, 1

</llo_original>
